<compile_context>
chip_gen: v6e
topology: v6e:2x2x1
jax: 0.10.0
libtpu: 0.0.40
codegen_flags: <defaults>
</compile_context>

<pallas_src>
import functools

import jax
import jax.numpy as jnp
from jax import lax
from jax.experimental import pallas as pl
from jax.experimental.pallas import tpu as pltpu

# MXU-operand dtype for the per-batch scratch slabs and the beta operand of
# the output matmul.  bf16 is the native MXU rate on all current TPU
# generations and halves scratch VMEM; accumulation stays f32 via
# preferred_element_type.  Set to jnp.float32 for bit-closer fidelity to the
# f32 PyTorch module (at the cost of the slow multi-pass f32 MXU path).
_MM_DTYPE = jnp.bfloat16
_NEG_BIG = -1e30  # additive row-mask value for padded rows (avoids inf-inf)


def _vmem_capacity_bytes():
    try:
        return int(pltpu.get_tpu_info().vmem_capacity_bytes)
    except Exception:
        return 64 << 20  # conservative fallback: v7x per-TensorCore VMEM


def _vmem_estimate(c, l_pad, tile_l, mm_bytes):
    """Rough per-core VMEM footprint of the kernel in bytes."""
    return (3 * c * l_pad * mm_bytes      # x / y / h scratch (single-buffered)
            + 2 * c * l_pad * 4           # x input block, double buffered (f32)
            + 2 * c * tile_l * 4          # output block, double buffered
            + 2 * 2 * c * c * 4           # M = Wq^T Wk and Wv, double buffered
            + 2 * l_pad * 4               # additive row mask
            + 4 * l_pad * tile_l * 4)     # attn / exp / beta f32 temporaries


def _choose_tile(l_pad, c, vmem_cap, mm_bytes):
    """Largest 128-multiple column tile whose footprint fits the VMEM budget."""
    budget = int(0.9 * vmem_cap)
    for tl in (512, 256, 128):
        if l_pad % tl == 0 and int(1.5 * _vmem_estimate(c, l_pad, tl, mm_bytes)) <= budget:
            return tl
    return 128  # l_pad is always a multiple of 128


def _self_attention_kernel(gamma_ref, mask_ref, x_ref, mqk_ref, wv_ref, o_ref,
                           xb_sc, y_sc, h_sc, *, tile_l, masked):
    j = pl.program_id(1)

    # 1x1 Conv1d == channel matmul (bias=False).  Built once per batch element
    # at the first column tile; kept resident in VMEM for the other tiles.
    @pl.when(j == 0)
    def _():
        xf = x_ref[0].astype(jnp.float32)                        # (C, Lp)
        xb_sc[...] = xf.astype(xb_sc.dtype)
        # y = (Wq^T Wk) x  ->  attn = f^T g = x^T y  (Q/K fused in the wrapper)
        y_sc[...] = jnp.dot(mqk_ref[...], xf,
                            preferred_element_type=jnp.float32).astype(y_sc.dtype)
        h_sc[...] = jnp.dot(wv_ref[...], xf,
                            preferred_element_type=jnp.float32).astype(h_sc.dtype)

    start = pl.multiple_of(j * tile_l, 128)
    y_t = y_sc[:, pl.ds(start, tile_l)]                          # (C, TL)

    # attn[i, jj] = x[:, i] . y[:, jj]: contract dim 0 of BOTH operands so the
    # MXU consumes the transposed LHS directly (no XLU relayout of x^T).
    attn = lax.dot_general(xb_sc[...], y_t, (((0,), (0,)), ((), ())),
                           preferred_element_type=jnp.float32)   # (Lp, TL)

    if masked:  # static: kill padded rows before the softmax (one VPU add)
        attn = attn + mask_ref[...]

    # F.softmax(..., dim=1): normalize over the row (first L) axis, which is
    # fully resident in this column tile.
    m = jnp.max(attn, axis=0, keepdims=True)
    e = jnp.exp(attn - m)  # TODO(synk): bf16 exp on v6e/v7x would double EUP rate
    beta = e * pl.reciprocal(jnp.sum(e, axis=0, keepdims=True), approx=True)

    x_t = x_ref[0, :, pl.ds(start, tile_l)].astype(jnp.float32)  # residual tile
    av = jnp.dot(h_sc[...], beta.astype(h_sc.dtype),
                 preferred_element_type=jnp.float32)             # (C, TL)
    o_ref[0] = (gamma_ref[0] * av + x_t).astype(o_ref.dtype)


@functools.partial(jax.jit, static_argnames=("n_valid", "tile_l"))
def _self_attention_flat(x_flat, row_mask, mqk, wv, gamma, *, n_valid, tile_l):
    """x_flat: (B, C, Lp) with Lp a multiple of 128 and of tile_l."""
    B, C, Lp = x_flat.shape
    masked = Lp > n_valid

    kernel = functools.partial(_self_attention_kernel,
                               tile_l=tile_l, masked=masked)

    grid_spec = pltpu.PrefetchScalarGridSpec(
        num_scalar_prefetch=0,
        grid=(B, Lp // tile_l),
        in_specs=[
            pl.BlockSpec(memory_space=pltpu.MemorySpace.SMEM),   # gamma (1,)
            pl.BlockSpec((Lp, 1), lambda b, j: (0, 0)),          # additive row mask
            pl.BlockSpec((1, C, Lp), lambda b, j: (b, 0, 0)),    # x (full L per batch)
            pl.BlockSpec((C, C), lambda b, j: (0, 0)),           # M = Wq^T Wk
            pl.BlockSpec((C, C), lambda b, j: (0, 0)),           # Wv
        ],
        out_specs=pl.BlockSpec((1, C, tile_l), lambda b, j: (b, 0, j)),
        scratch_shapes=[
            pltpu.VMEM((C, Lp), _MM_DTYPE),                      # x in MXU dtype
            pltpu.VMEM((C, Lp), _MM_DTYPE),                      # y = (Wq^T Wk) x
            pltpu.VMEM((C, Lp), _MM_DTYPE),                      # h = Wv x
        ],
    )

    # Explicit VMEM budget: estimated footprint with 1.5x margin, capped at
    # ~90% of the chip's physical VMEM (64 MiB/TC on v7x, 128 MiB on v5e/v6e).
    mm_bytes = jnp.dtype(_MM_DTYPE).itemsize
    est = _vmem_estimate(C, Lp, tile_l, mm_bytes)
    vmem_limit = int(min(max(int(1.5 * est), 32 << 20),
                         int(0.9 * _vmem_capacity_bytes())))

    # TODO(synk): for B == 1 on v7x, split the column range across a leading
    # core axis (each core redoing the cheap j==0 projections) for 2x megacore.
    return pl.pallas_call(
        kernel,
        out_shape=jax.ShapeDtypeStruct((B, C, Lp), x_flat.dtype),
        grid_spec=grid_spec,
        compiler_params=pltpu.CompilerParams(
            dimension_semantics=("parallel", "arbitrary"),
            vmem_limit_bytes=vmem_limit),
    )(gamma, row_mask, x_flat, mqk, wv)


def self_attention(x, wq, wk, wv, gamma):
    """x: (B, C, *spatial).  Mirrors SelfAttention.forward."""
    size = x.shape
    B, C = size[0], size[1]
    x_flat = x.reshape(B, C, -1)
    L = x_flat.shape[-1]
    Lp = ((max(L, 128) + 127) // 128) * 128            # lane-dense last dim
    mm_bytes = jnp.dtype(_MM_DTYPE).itemsize
    tile_l = _choose_tile(Lp, C, _vmem_capacity_bytes(), mm_bytes)
    if Lp != L:
        x_flat = jnp.pad(x_flat, ((0, 0), (0, 0), (0, Lp - L)))
    row_mask = jnp.where(jnp.arange(Lp) < L, 0.0, _NEG_BIG)
    row_mask = row_mask.astype(jnp.float32).reshape(Lp, 1)
    mqk = (wq.T @ wk).astype(jnp.float32)              # (C, C): fused Q/K convs
    o = _self_attention_flat(x_flat, row_mask, mqk, wv, gamma,
                             n_valid=L, tile_l=tile_l)
    if Lp != L:
        o = o[:, :, :L]
    return o.reshape(size)


def self_attention_reference(x, wq, wk, wv, gamma):
    """Pure-JAX reference mirroring the PyTorch forward exactly (f32)."""
    size = x.shape
    B, C = size[0], size[1]
    xf = x.reshape(B, C, -1).astype(jnp.float32)
    f = jnp.einsum("oc,bcl->bol", wq, xf)
    g = jnp.einsum("oc,bcl->bol", wk, xf)
    h = jnp.einsum("oc,bcl->bol", wv, xf)
    attn = jnp.einsum("bci,bcj->bij", f, g)            # (B, L, L)
    beta = jax.nn.softmax(attn, axis=1)                # dim=1
    o = gamma[0] * jnp.einsum("bck,bkj->bcj", h, beta) + xf
    return o.reshape(size)


def init_params(key, n_channels, div):
    """Deterministic kaiming_normal_ init (fan_in, gain=sqrt(2)), bias=False."""
    c_out = n_channels // div if n_channels > 1 else n_channels
    kq, kk, kv = jax.random.split(key, 3)
    std = (2.0 / n_channels) ** 0.5                    # fan_in = n_channels * ks(=1)
    wq = jax.random.normal(kq, (c_out, n_channels), jnp.float32) * std
    wk = jax.random.normal(kk, (c_out, n_channels), jnp.float32) * std
    wv = jax.random.normal(kv, (n_channels, n_channels), jnp.float32) * std
    gamma = jnp.array([0.0], dtype=jnp.float32)        # nn.Parameter(torch.tensor([0.0]))
    return wq, wk, wv, gamma


if __name__ == "__main__":
    key = jax.random.PRNGKey(0)
    k_x, k_p, k_x2 = jax.random.split(key, 3)

    B, C, H, W = 2, 4, 16, 16                          # NCHW input, L = H*W = 256
    div = 2
    x = jax.random.normal(k_x, (B, C, H, W), jnp.float32)
    wq, wk, wv, gamma0 = init_params(k_p, C, div)
    gamma_nz = jnp.array([0.3], dtype=jnp.float32)

    # Tolerance: bf16 MXU operands + approx reciprocal vs the exact f32
    # reference; tighten to 2e-3 when _MM_DTYPE is float32.
    tol = 2e-2 if _MM_DTYPE == jnp.bfloat16 else 2e-3

    # Module's true init (gamma = 0 -> identity/residual path): exact.
    out0 = jax.block_until_ready(self_attention(x, wq, wk, wv, gamma0))
    ref0 = self_attention_reference(x, wq, wk, wv, gamma0)
    assert out0.shape == (B, C, H, W)
    assert jnp.allclose(out0, ref0, atol=1e-5, rtol=1e-5)

    # Nonzero gamma exercises the full attention path.
    out = jax.block_until_ready(self_attention(x, wq, wk, wv, gamma_nz))
    ref = self_attention_reference(x, wq, wk, wv, gamma_nz)
    assert jnp.allclose(out, ref, atol=tol, rtol=tol), \
        float(jnp.max(jnp.abs(out - ref)))

    # Non-128-multiple spatial size (L = 192) exercises the pad + row-mask path.
    x2 = jax.random.normal(k_x2, (B, C, 16, 12), jnp.float32)
    out2 = jax.block_until_ready(self_attention(x2, wq, wk, wv, gamma_nz))
    ref2 = self_attention_reference(x2, wq, wk, wv, gamma_nz)
    assert out2.shape == (B, C, 16, 12)
    assert jnp.allclose(out2, ref2, atol=tol, rtol=tol), \
        float(jnp.max(jnp.abs(out2 - ref2)))

    print("KERNEL_OK")
</pallas_src>

<mosaic_0001>
module attributes {stable_mosaic.version = 11 : i64} {
  func.func @_self_attention_kernel(%arg0: i32, %arg1: i32, %arg2: memref<1xf32, #tpu.memory_space<smem>>, %arg3: memref<256x1xf32, #tpu.memory_space<vmem>>, %arg4: memref<1x4x256xf32, #tpu.memory_space<vmem>>, %arg5: memref<4x4xf32, #tpu.memory_space<vmem>>, %arg6: memref<4x4xf32, #tpu.memory_space<vmem>>, %arg7: memref<1x4x256xf32, #tpu.memory_space<vmem>>, %arg8: memref<4x256xbf16, #tpu.memory_space<vmem>>, %arg9: memref<4x256xbf16, #tpu.memory_space<vmem>>, %arg10: memref<4x256xbf16, #tpu.memory_space<vmem>>) attributes {dimension_semantics = [#tpu.dimension_semantics<parallel>, #tpu.dimension_semantics<arbitrary>], iteration_bounds = array<i64: 2, 1>, scalar_prefetch = 0 : i64, scratch_operands = 3 : i64, tpu.core_type = #tpu.core_type<tc>, window_params = [{transform_indices = @transform_0, window_bounds = array<i64: 1>}, {pipeline_mode = #tpu.pipeline_mode<synchronous>, transform_indices = @transform_1, window_bounds = array<i64: 256, 1>}, {transform_indices = @transform_2, window_bounds = array<i64: 1, 4, 256>}, {pipeline_mode = #tpu.pipeline_mode<synchronous>, transform_indices = @transform_3, window_bounds = array<i64: 4, 4>}, {pipeline_mode = #tpu.pipeline_mode<synchronous>, transform_indices = @transform_4, window_bounds = array<i64: 4, 4>}, {transform_indices = @transform_5, window_bounds = array<i64: 1, 4, 256>}]} {
    %c0_i32 = arith.constant 0 : i32
    %0 = arith.cmpi eq, %arg1, %c0_i32 : i32
    %1 = arith.extui %0 : i1 to i32
    %c0_i32_0 = arith.constant 0 : i32
    %2 = arith.cmpi ne, %1, %c0_i32_0 : i32
    scf.if %2 {
      %c0_14 = arith.constant 0 : index
      %c0_15 = arith.constant 0 : index
      %c0_16 = arith.constant 0 : index
      %32 = vector.load %arg4[%c0_14, %c0_15, %c0_16] : memref<1x4x256xf32, #tpu.memory_space<vmem>>, vector<1x4x256xf32>
      %33 = vector.shape_cast %32 : vector<1x4x256xf32> to vector<4x256xf32>
      %34 = arith.truncf %33 : vector<4x256xf32> to vector<4x256xbf16>
      %c0_17 = arith.constant 0 : index
      %c0_18 = arith.constant 0 : index
      %35 = vector.load %arg8[%c0_17, %c0_18] : memref<4x256xbf16, #tpu.memory_space<vmem>>, vector<4x256xbf16>
      tpu.vector_store %arg8[%c0_17, %c0_18], %34 {strides = array<i32>} : memref<4x256xbf16, #tpu.memory_space<vmem>>, vector<4x256xbf16>,
      %c0_19 = arith.constant 0 : index
      %c0_20 = arith.constant 0 : index
      %36 = vector.load %arg5[%c0_19, %c0_20] : memref<4x4xf32, #tpu.memory_space<vmem>>, vector<4x4xf32>
      %cst_21 = arith.constant dense<0.000000e+00> : vector<4x256xf32>
      %37 = tpu.matmul %36, %33, %cst_21 {dimension_numbers = #tpu.dot_dimension_numbers<[1], [0], [0], [1], [0, 0, 1, 1], [], []>} : vector<4x4xf32>, vector<4x256xf32>, vector<4x256xf32> -> vector<4x256xf32>
      %38 = arith.truncf %37 : vector<4x256xf32> to vector<4x256xbf16>
      %c0_22 = arith.constant 0 : index
      %c0_23 = arith.constant 0 : index
      %39 = vector.load %arg9[%c0_22, %c0_23] : memref<4x256xbf16, #tpu.memory_space<vmem>>, vector<4x256xbf16>
      tpu.vector_store %arg9[%c0_22, %c0_23], %38 {strides = array<i32>} : memref<4x256xbf16, #tpu.memory_space<vmem>>, vector<4x256xbf16>,
      %c0_24 = arith.constant 0 : index
      %c0_25 = arith.constant 0 : index
      %40 = vector.load %arg6[%c0_24, %c0_25] : memref<4x4xf32, #tpu.memory_space<vmem>>, vector<4x4xf32>
      %cst_26 = arith.constant dense<0.000000e+00> : vector<4x256xf32>
      %41 = tpu.matmul %40, %33, %cst_26 {dimension_numbers = #tpu.dot_dimension_numbers<[1], [0], [0], [1], [0, 0, 1, 1], [], []>} : vector<4x4xf32>, vector<4x256xf32>, vector<4x256xf32> -> vector<4x256xf32>
      %42 = arith.truncf %41 : vector<4x256xf32> to vector<4x256xbf16>
      %c0_27 = arith.constant 0 : index
      %c0_28 = arith.constant 0 : index
      %43 = vector.load %arg10[%c0_27, %c0_28] : memref<4x256xbf16, #tpu.memory_space<vmem>>, vector<4x256xbf16>
      tpu.vector_store %arg10[%c0_27, %c0_28], %42 {strides = array<i32>} : memref<4x256xbf16, #tpu.memory_space<vmem>>, vector<4x256xbf16>,
    } else {
    }
    %c256_i32 = arith.constant 256 : i32
    %3 = arith.muli %arg1, %c256_i32 : i32
    %4 = tpu.assume_multiple %3, 128 : i32
    %c0 = arith.constant 0 : index
    %5 = arith.index_cast %4 : i32 to index
    %6 = vector.load %arg9[%c0, %5] : memref<4x256xbf16, #tpu.memory_space<vmem>>, vector<4x256xbf16>
    %c0_1 = arith.constant 0 : index
    %c0_2 = arith.constant 0 : index
    %7 = vector.load %arg8[%c0_1, %c0_2] : memref<4x256xbf16, #tpu.memory_space<vmem>>, vector<4x256xbf16>
    %cst = arith.constant dense<0.000000e+00> : vector<256x256xf32>
    %8 = tpu.matmul %7, %6, %cst {dimension_numbers = #tpu.dot_dimension_numbers<[0], [0], [1], [1], [0, 1, 1, 1], [], []>} : vector<4x256xbf16>, vector<4x256xbf16>, vector<256x256xf32> -> vector<256x256xf32>
    %cst_3 = arith.constant dense<0xFF800000> : vector<256xf32>
    %9 = vector.multi_reduction <maximumf>, %8, %cst_3 [0] : vector<256x256xf32> to vector<256xf32>
    %10 = vector.shape_cast %9 : vector<256xf32> to vector<1x256xf32>
    %11 = vector.broadcast %10 : vector<1x256xf32> to vector<256x256xf32>
    %12 = arith.subf %8, %11 : vector<256x256xf32>
    %13 = math.exp %12 : vector<256x256xf32>
    %cst_4 = arith.constant dense<0.000000e+00> : vector<256xf32>
    %14 = vector.multi_reduction <add>, %13, %cst_4 [0] : vector<256x256xf32> to vector<256xf32>
    %15 = vector.shape_cast %14 : vector<256xf32> to vector<1x256xf32>
    %16 = tpu.reciprocal %15 {approx = true} : vector<1x256xf32> -> vector<1x256xf32>
    %17 = vector.broadcast %16 : vector<1x256xf32> to vector<256x256xf32>
    %18 = arith.mulf %13, %17 : vector<256x256xf32>
    %c0_5 = arith.constant 0 : index
    %c0_6 = arith.constant 0 : index
    %19 = arith.index_cast %4 : i32 to index
    %20 = vector.load %arg4[%c0_5, %c0_6, %19] : memref<1x4x256xf32, #tpu.memory_space<vmem>>, vector<1x4x256xf32>
    %21 = vector.shape_cast %20 : vector<1x4x256xf32> to vector<4x256xf32>
    %c0_7 = arith.constant 0 : index
    %c0_8 = arith.constant 0 : index
    %22 = vector.load %arg10[%c0_7, %c0_8] : memref<4x256xbf16, #tpu.memory_space<vmem>>, vector<4x256xbf16>
    %23 = arith.truncf %18 : vector<256x256xf32> to vector<256x256xbf16>
    %cst_9 = arith.constant dense<0.000000e+00> : vector<4x256xf32>
    %24 = tpu.matmul %22, %23, %cst_9 {dimension_numbers = #tpu.dot_dimension_numbers<[1], [0], [0], [1], [0, 0, 1, 1], [], []>} : vector<4x256xbf16>, vector<256x256xbf16>, vector<4x256xf32> -> vector<4x256xf32>
    %c0_10 = arith.constant 0 : index
    %25 = memref.load %arg2[%c0_10] : memref<1xf32, #tpu.memory_space<smem>>
    %26 = vector.broadcast %25 : f32 to vector<4x256xf32>
    %27 = arith.mulf %26, %24 : vector<4x256xf32>
    %28 = arith.addf %27, %21 : vector<4x256xf32>
    %c0_11 = arith.constant 0 : index
    %c0_12 = arith.constant 0 : index
    %c0_13 = arith.constant 0 : index
    %29 = vector.load %arg7[%c0_11, %c0_12, %c0_13] : memref<1x4x256xf32, #tpu.memory_space<vmem>>, vector<1x4x256xf32>
    %30 = vector.shape_cast %29 : vector<1x4x256xf32> to vector<4x256xf32>
    %31 = vector.shape_cast %28 : vector<4x256xf32> to vector<1x4x256xf32>
    tpu.vector_store %arg7[%c0_11, %c0_12, %c0_13], %31 {strides = array<i32>} : memref<1x4x256xf32, #tpu.memory_space<vmem>>, vector<1x4x256xf32>,
    return
  }
  func.func @transform_0(%arg0: i32, %arg1: i32) -> i32 {
    %c0_i32 = arith.constant 0 : i32
    %c0_i32_0 = arith.constant 0 : i32
    return %c0_i32 : i32
  }
  func.func @transform_1(%arg0: i32, %arg1: i32) -> (i32, i32) {
    %c0_i32 = arith.constant 0 : i32
    %c0_i32_0 = arith.constant 0 : i32
    %c0_i32_1 = arith.constant 0 : i32
    return %c0_i32, %c0_i32_0 : i32, i32
  }
  func.func @transform_2(%arg0: i32, %arg1: i32) -> (i32, i32, i32) {
    %c0_i32 = arith.constant 0 : i32
    %c0_i32_0 = arith.constant 0 : i32
    %c0_i32_1 = arith.constant 0 : i32
    return %arg0, %c0_i32, %c0_i32_0 : i32, i32, i32
  }
  func.func @transform_3(%arg0: i32, %arg1: i32) -> (i32, i32) {
    %c0_i32 = arith.constant 0 : i32
    %c0_i32_0 = arith.constant 0 : i32
    %c0_i32_1 = arith.constant 0 : i32
    return %c0_i32, %c0_i32_0 : i32, i32
  }
  func.func @transform_4(%arg0: i32, %arg1: i32) -> (i32, i32) {
    %c0_i32 = arith.constant 0 : i32
    %c0_i32_0 = arith.constant 0 : i32
    %c0_i32_1 = arith.constant 0 : i32
    return %c0_i32, %c0_i32_0 : i32, i32
  }
  func.func @transform_5(%arg0: i32, %arg1: i32) -> (i32, i32, i32) {
    %c0_i32 = arith.constant 0 : i32
    %c0_i32_0 = arith.constant 0 : i32
    return %arg0, %c0_i32, %arg1 : i32, i32, i32
  }
}

</mosaic_0001>

<llo_original>
// kernel: _self_attention_flat.1
$region0: #{_self_attention_flat.1}
  #allocation0 [shape = 'u32[]', space=smem, size = 0x4, offset = 0x4, fixed_abs, tag = 'smem constant byte address 0x4 - core index']
  #allocation1 [shape = 'u32[144,128]{1,0:T(1,128)}', space=vmem, size = 0x12000, scoped, tag = 'internal scratch']
  #allocation2 [shape = 'bf16[4,256]{1,0:T(4,128)(2,1)}', space=vmem, size = 0x800, scoped, tag = 'scratch operand']
  #allocation3 [shape = 'bf16[4,256]{1,0:T(4,128)(2,1)}', space=vmem, size = 0x800, scoped, tag = 'scratch operand']
  #allocation4 [shape = 'bf16[4,256]{1,0:T(4,128)(2,1)}', space=vmem, size = 0x800, scoped, tag = 'scratch operand']
  #allocation5 [shape = 'f32[1]{0:T(128)S(6)}', space=smem, size = 0x200, scoped, tag = 'scoped memory for _self_attention_flat.1']
  %s0 = inlined_call_operand.<no memory space> [shape: f32[1], index: 0, kind: input, shape index: {}]
  %s1 = inlined_call_operand.vmem [shape: f32[256,1], index: 1, kind: input, shape index: {}]
  %s2 = inlined_call_operand.vmem [shape: f32[2,4,256], index: 2, kind: input, shape index: {}]
  %s3 = inlined_call_operand.vmem [shape: f32[4,4], index: 3, kind: input, shape index: {}]
  %s4 = inlined_call_operand.vmem [shape: f32[4,4], index: 4, kind: input, shape index: {}]
  %s5 = inlined_call_operand.hbm [shape: f32[2,4,256], index: 5, kind: output, shape index: {}]
  %s6 = sld [smem:[#allocation0]]
  $region57: #{_self_attention_flat.1} parent=0
    _
  %s8 = ssub.s32 1, %s6
  %s9 = scalar_select 0, %s8, %s6
  %10 = sst [smem:[#allocation5]] %s0
  $region1: #{_self_attention_flat.1} parent=0
    #allocation6 [shape = 'u8[8192]{0}', space=vmem, size = 0x2000, scoped, tag = 'output window, operand 0']
    #allocation7 [shape = 's32[2]{0}', space=sflag, size = 0x8, scoped, tag = 'scoped memory for _self_attention_flat.1']
    %11 = vsyncpa [#allocation7], 0
    %s12 = scalar_lea.sflag [#allocation7], 1
    %13 = vsyncpa %s12, 0
    loop: start=0, step=1, limit=4
    $region2: #{_self_attention_flat.1} parent=1 // loop_pre_header
      _
    $region3: #{_self_attention_flat.1} parent=1 // loop_header
      %s15 = sphi 0, %s19
      %p16 = scmp.ge.s32.totalorder %s15, 4
      %s22 = sphi 0, %s34
      %s23 = sphi 0, %s30
      %s24 = sphi 0, %s22
      %s25 = sphi 0, %s23
      %s26 = sphi 0, %s24
      %s27 = sphi 0, %s25
      %s35 = sphi 0, %s35
      %s37 = sphi 0, %s35
      %s38 = sphi 0, %s37
      %s52 = sphi 0, %s38
      %s56 = sphi 0, %s56
      %s58 = sphi 0, %s56
      %s59 = sphi 0, %s58
      %s73 = sphi 0, %s59
      %s79 = sphi 0, %s81
      %s82 = sphi 0, %s79
      %s83 = sphi 0, %s82
      %s99 = sphi 0, %s83
      %s103 = sphi 0, %s103
      %s105 = sphi 0, %s103
      %s106 = sphi 0, %s105
      %s120 = sphi 0, %s106
      %s124 = sphi 0, %s124
      %s126 = sphi 0, %s124
      %s127 = sphi 0, %s126
      %s141 = sphi 0, %s127
      %s149 = sphi 0, %s151
      %s152 = sphi 0, %s149
      %s153 = sphi 0, %s152
      %s169 = sphi 0, %s153
    $region4: #{_self_attention_flat.1} parent=1 // loop_header_branch
      %18 = sbr.rel (%p16) target = $region8
    $region5: #{_self_attention_flat.1} parent=1 // loop_body
      %s20 = ssub.s32 %s15, 1
      %s21 = ssub.s32 %s15, 2
      %s28 = sadd.s32 1, %s23
      %p29 = scmp.ge.s32.totalorder %s28, 1
      %s30 = scalar_select %p29, 0, %s28
      %s31 = sadd.s32 1, %s22
      %s32 = scalar_select %p29, %s31, %s22
      %p33 = scmp.ge.s32.totalorder %s32, 2
      %s34 = scalar_select %p33, 0, %s32
      %s36 = sadd.s32 %s35, 1
      %p39 = scmp.eq.s32.totalorder %s15, 1
      %p40 = scmp.ne.s32.totalorder %s35, %s37
      %p41 = scmp.eq.s32.totalorder %s15, 0
      %p42 = por %p40, %p41
      %p43 = scmp.ne.s32.totalorder %s35, %s37
      %p44 = scmp.eq.s32.totalorder %s20, 1
      %p45 = por %p43, %p44
      %p46 = scmp.ne.s32.totalorder %s37, %s38
      %p47 = scmp.eq.s32.totalorder %s20, 0
      %p48 = por %p46, %p47
      %p49 = scmp.ne.s32.totalorder %s37, %s38
      %p50 = scmp.eq.s32.totalorder %s21, 1
      %p51 = por %p49, %p50
      %p53 = scmp.ne.s32.totalorder %s38, %s52
      %p54 = scmp.eq.s32.totalorder %s21, 0
      %p55 = por %p53, %p54
      %s57 = sadd.s32 %s56, 1
      %p60 = scmp.eq.s32.totalorder %s15, 1
      %p61 = scmp.ne.s32.totalorder %s56, %s58
      %p62 = scmp.eq.s32.totalorder %s15, 0
      %p63 = por %p61, %p62
      %p64 = scmp.ne.s32.totalorder %s56, %s58
      %p65 = scmp.eq.s32.totalorder %s20, 1
      %p66 = por %p64, %p65
      %p67 = scmp.ne.s32.totalorder %s58, %s59
      %p68 = scmp.eq.s32.totalorder %s20, 0
      %p69 = por %p67, %p68
      %p70 = scmp.ne.s32.totalorder %s58, %s59
      %p71 = scmp.eq.s32.totalorder %s21, 1
      %p72 = por %p70, %p71
      %p74 = scmp.ne.s32.totalorder %s59, %s73
      %p75 = scmp.eq.s32.totalorder %s21, 0
      %p76 = por %p74, %p75
      %s77 = ssub.s32 %s22, %s34
      %p78 = scmp.eq.s32.totalorder %s77, 0
      %s80 = sadd.s32 %s79, 1
      %s81 = scalar_select %p78, %s79, %s80
      %p84 = pneg %p78
      %p85 = scmp.eq.s32.totalorder %s15, 1
      %p86 = por %p84, %p85
      %p87 = scmp.ne.s32.totalorder %s79, %s82
      %p88 = scmp.eq.s32.totalorder %s15, 0
      %p89 = por %p87, %p88
      %p90 = scmp.ne.s32.totalorder %s79, %s82
      %p91 = scmp.eq.s32.totalorder %s20, 1
      %p92 = por %p90, %p91
      %p93 = scmp.ne.s32.totalorder %s82, %s83
      %p94 = scmp.eq.s32.totalorder %s20, 0
      %p95 = por %p93, %p94
      %p96 = scmp.ne.s32.totalorder %s82, %s83
      %p97 = scmp.eq.s32.totalorder %s21, 1
      %p98 = por %p96, %p97
      %p100 = scmp.ne.s32.totalorder %s83, %s99
      %p101 = scmp.eq.s32.totalorder %s21, 0
      %p102 = por %p100, %p101
      %s104 = sadd.s32 %s103, 1
      %p107 = scmp.eq.s32.totalorder %s15, 1
      %p108 = scmp.ne.s32.totalorder %s103, %s105
      %p109 = scmp.eq.s32.totalorder %s15, 0
      %p110 = por %p108, %p109
      %p111 = scmp.ne.s32.totalorder %s103, %s105
      %p112 = scmp.eq.s32.totalorder %s20, 1
      %p113 = por %p111, %p112
      %p114 = scmp.ne.s32.totalorder %s105, %s106
      %p115 = scmp.eq.s32.totalorder %s20, 0
      %p116 = por %p114, %p115
      %p117 = scmp.ne.s32.totalorder %s105, %s106
      %p118 = scmp.eq.s32.totalorder %s21, 1
      %p119 = por %p117, %p118
      %p121 = scmp.ne.s32.totalorder %s106, %s120
      %p122 = scmp.eq.s32.totalorder %s21, 0
      %p123 = por %p121, %p122
      %s125 = sadd.s32 %s124, 1
      %p128 = scmp.eq.s32.totalorder %s15, 1
      %p129 = scmp.ne.s32.totalorder %s124, %s126
      %p130 = scmp.eq.s32.totalorder %s15, 0
      %p131 = por %p129, %p130
      %p132 = scmp.ne.s32.totalorder %s124, %s126
      %p133 = scmp.eq.s32.totalorder %s20, 1
      %p134 = por %p132, %p133
      %p135 = scmp.ne.s32.totalorder %s126, %s127
      %p136 = scmp.eq.s32.totalorder %s20, 0
      %p137 = por %p135, %p136
      %p138 = scmp.ne.s32.totalorder %s126, %s127
      %p139 = scmp.eq.s32.totalorder %s21, 1
      %p140 = por %p138, %p139
      %p142 = scmp.ne.s32.totalorder %s127, %s141
      %p143 = scmp.eq.s32.totalorder %s21, 0
      %p144 = por %p142, %p143
      %s145 = ssub.s32 %s22, %s34
      %s146 = ssub.s32 %s23, %s30
      %s147 = sor.u32 %s145, %s146
      %p148 = scmp.eq.s32.totalorder %s147, 0
      %s150 = sadd.s32 %s149, 1
      %s151 = scalar_select %p148, %s149, %s150
      %p154 = pneg %p148
      %p155 = scmp.eq.s32.totalorder %s15, 1
      %p156 = por %p154, %p155
      %p157 = scmp.ne.s32.totalorder %s149, %s152
      %p158 = scmp.eq.s32.totalorder %s15, 0
      %p159 = por %p157, %p158
      %p160 = scmp.ne.s32.totalorder %s149, %s152
      %p161 = scmp.eq.s32.totalorder %s20, 1
      %p162 = por %p160, %p161
      %p163 = scmp.ne.s32.totalorder %s152, %s153
      %p164 = scmp.eq.s32.totalorder %s20, 0
      %p165 = por %p163, %p164
      %p166 = scmp.ne.s32.totalorder %s152, %s153
      %p167 = scmp.eq.s32.totalorder %s21, 1
      %p168 = por %p166, %p167
      %p170 = scmp.ne.s32.totalorder %s153, %s169
      %p171 = scmp.eq.s32.totalorder %s21, 0
      %p172 = por %p170, %p171
      %p173 = scmp.le.s32.totalorder 1, %s15
      %p174 = scmp.lt.s32.totalorder %s15, 3
      %p175 = pnand %p173, %p174
      %p176 = pneg %p175
      // Predicated region
      $region9: #{_self_attention_flat.1} parent=5 // pred_check
        _
      $region10: #{_self_attention_flat.1} parent=5 // pred_check_branch
        %178 = sbr.rel (%p175) target = $region12
      $region11: #{_self_attention_flat.1} parent=5 // pred_region
        %s179 = ssub.s32 %s15, 1
        // Predicated region
        $region13: #{_self_attention_flat.1} parent=11 // pred_check
          %p180 = pneg %p48
        $region14: #{_self_attention_flat.1} parent=11 // pred_check_branch
          %182 = sbr.rel (%p180) target = $region16
        $region15: #{_self_attention_flat.1} parent=11 // pred_region
          _
        $region16: #{_self_attention_flat.1} parent=11 // pred_fallthru
          _
        // Predicated region
        $region17: #{_self_attention_flat.1} parent=11 // pred_check
          %p183 = pneg %p69
        $region18: #{_self_attention_flat.1} parent=11 // pred_check_branch
          %185 = sbr.rel (%p183) target = $region20
        $region19: #{_self_attention_flat.1} parent=11 // pred_region
          _
        $region20: #{_self_attention_flat.1} parent=11 // pred_fallthru
          _
        // Predicated region
        $region21: #{_self_attention_flat.1} parent=11 // pred_check
          %p186 = pneg %p116
        $region22: #{_self_attention_flat.1} parent=11 // pred_check_branch
          %188 = sbr.rel (%p186) target = $region24
        $region23: #{_self_attention_flat.1} parent=11 // pred_region
          _
        $region24: #{_self_attention_flat.1} parent=11 // pred_fallthru
          _
        // Predicated region
        $region25: #{_self_attention_flat.1} parent=11 // pred_check
          %p189 = pneg %p137
        $region26: #{_self_attention_flat.1} parent=11 // pred_check_branch
          %191 = sbr.rel (%p189) target = $region28
        $region27: #{_self_attention_flat.1} parent=11 // pred_region
          _
        $region28: #{_self_attention_flat.1} parent=11 // pred_fallthru
          _
      $region12: #{_self_attention_flat.1} parent=5 // pred_fallthru
        _
      %p192 = scmp.lt.s32.totalorder %s15, 2
      // Predicated region
      $region29: #{_self_attention_flat.1} parent=5 // pred_check
        %p193 = pneg %p192
      $region30: #{_self_attention_flat.1} parent=5 // pred_check_branch
        %195 = sbr.rel (%p193) target = $region32
      $region31: #{_self_attention_flat.1} parent=5 // pred_region
        // Predicated region
        $region33: #{_self_attention_flat.1} parent=31 // pred_check
          %p196 = pneg %p89
        $region34: #{_self_attention_flat.1} parent=31 // pred_check_branch
          %198 = sbr.rel (%p196) target = $region36
        $region35: #{_self_attention_flat.1} parent=31 // pred_region
          %p199 = scmp.lt.s32.totalorder %s22, 1
          %s200 = scalar_select %p199, %s22, 1
          %s201 = smul.addr %s200, 2
          %s202 = smul.addr %s201, 4
          %s203 = scalar_lea.vmem %s2, %s202
        $region36: #{_self_attention_flat.1} parent=31 // pred_fallthru
          _
      $region32: #{_self_attention_flat.1} parent=5 // pred_fallthru
        _
      %p204 = scmp.le.s32.totalorder 1, %s15
      %p205 = scmp.lt.s32.totalorder %s15, 3
      %p206 = pnand %p204, %p205
      %p207 = pneg %p206
      // Predicated region
      $region37: #{_self_attention_flat.1} parent=5 // pred_check
        _
      $region38: #{_self_attention_flat.1} parent=5 // pred_check_branch
        %209 = sbr.rel (%p206) target = $region40
      $region39: #{_self_attention_flat.1} parent=5 // pred_region
        %s210 = ssub.s32 %s15, 1
        %p211 = pneg %p48
        %p212 = pneg %p45
        %p213 = pneg %p69
        %p214 = pneg %p66
        %p215 = scmp.lt.s32.totalorder %s24, 1
        %s216 = scalar_select %p215, %s24, 1
        %s217 = smul.addr %s216, 2
        %s218 = smul.addr %s217, 4
        %s219 = scalar_lea.vmem %s2, %s218
        %p220 = pneg %p95
        %p221 = pneg %p92
        %p222 = pneg %p116
        %p223 = pneg %p113
        %p224 = pneg %p137
        %p225 = pneg %p134
        %p226 = pneg %p165
        %p227 = pneg %p162
        %s228 = sand.u32 %s152, 1
        %s229 = scalar_lea.sflag [#allocation7], %s228
        %s230 = sand.u32 %s152, 1
        %s231 = smul.addr %s230, 8
        %s232 = scalar_lea.vmem [#allocation6], %s231
        %p233 = scmp.lt.s32.totalorder %s24, 1
        %s234 = scalar_select %p233, %s24, 1
        %s235 = smul.addr %s234, 2
        %s236 = smul.addr %s235, 4
        %s237 = scalar_lea.vmem %s2, %s236
        %s238 = smul.u32 2, %s25
        %p240 = scmp.eq.s32.totalorder %s25, 0
        // Predicated region
        $region41: #{_self_attention_flat.1} parent=39 // pred_check
          %p241 = pneg %p240
        $region42: #{_self_attention_flat.1} parent=39 // pred_check_branch
          %243 = sbr.rel (%p241) target = $region44
        $region43: #{_self_attention_flat.1} parent=39 // pred_region
          %v244 = vld [vmem:[%s237] sm:$0xff]
          %v246 = vcombine.high %v244, %v244
          %v248 = vpack.c.bf16 %v244, %v244
          %v249 = vpack.c.bf16 %v246, %v246
          %v252 = vcombine.low %v248, %v249
          %v254 = vunpack.c.l.s4 1983009808
          %v255 = vunpack.c.0.s8 %v254
          %v256 = vlaneseq
          %v257 = vshrl.u32 %v256, 7
          %v258 = vsub.s32 %v255, %v257
          %v259 = vrot.slane %v252, %v258
          %261 = vst [vmem:[#allocation2] sm:$0xf] %v259
          %v262 = vld [vmem:[%s3] sm:$0xf]
          %vm263 = vcmask 31744
          %v265 = vsel %vm263, %v262, 0
          %vm267 = vcmask 1043456
          %v268 = vsel %vm267, %v244, 0
          %v270 = vsel %vm267, %v246, 0
          %272 = vmatprep.subr.mxu0 0.0
          %273 = vmatpush1.msra.mxu0 0.0
          %274 = vmatprep.subr.mxu0 0.0
          %275 = vmatpush1.msra.mxu0 0.0
          %276 = vmatprep.subr.mxu0 0.0
          %277 = vmatpush1.msra.mxu0 0.0
          %278 = vmatprep.subr.mxu0 0.0
          %279 = vmatpush1.msra.mxu0 0.0
          %280 = vmatprep.subr.mxu0 0.0
          %281 = vmatpush1.msra.mxu0 0.0
          %282 = vmatprep.subr.mxu0 0.0
          %283 = vmatpush1.msra.mxu0 0.0
          %284 = vmatprep.subr.mxu0 0.0
          %285 = vmatpush1.msra.mxu0 0.0
          %286 = vmatprep.subr.mxu0 0.0
          %287 = vmatpush1.msra.mxu0 0.0
          %288 = vmatprep.subr.mxu0 0.0
          %289 = vmatpush1.msra.mxu0 0.0
          %290 = vmatprep.subr.mxu0 0.0
          %291 = vmatpush1.msra.mxu0 0.0
          %292 = vmatprep.subr.mxu0 0.0
          %293 = vmatpush1.msra.mxu0 0.0
          %294 = vmatprep.subr.mxu0 0.0
          %295 = vmatpush1.msra.mxu0 0.0
          %296 = vmatprep.subr.mxu0 0.0
          %297 = vmatpush1.msra.mxu0 0.0
          %298 = vmatprep.subr.mxu0 0.0
          %299 = vmatpush1.msra.mxu0 0.0
          %300 = vmatprep.subr.mxu0 0.0
          %301 = vmatpush1.msra.mxu0 0.0
          %302 = vmatprep.subr.mxu0 %v270
          %303 = vmatpush1.msra.mxu0 %v268
          %304 = vmatprep.subr.mxu0 0.0
          %305 = vmatpush2.msra.mxu0 0.0
          %306 = vmatprep.subr.mxu0 0.0
          %307 = vmatpush2.msra.mxu0 0.0
          %308 = vmatprep.subr.mxu0 0.0
          %309 = vmatpush2.msra.mxu0 0.0
          %310 = vmatprep.subr.mxu0 0.0
          %311 = vmatpush2.msra.mxu0 0.0
          %312 = vmatprep.subr.mxu0 0.0
          %313 = vmatpush2.msra.mxu0 0.0
          %314 = vmatprep.subr.mxu0 0.0
          %315 = vmatpush2.msra.mxu0 0.0
          %316 = vmatprep.subr.mxu0 0.0
          %317 = vmatpush2.msra.mxu0 0.0
          %318 = vmatprep.subr.mxu0 0.0
          %319 = vmatpush2.msra.mxu0 0.0
          %320 = vmatprep.subr.mxu0 0.0
          %321 = vmatpush2.msra.mxu0 0.0
          %322 = vmatprep.subr.mxu0 0.0
          %323 = vmatpush2.msra.mxu0 0.0
          %324 = vmatprep.subr.mxu0 0.0
          %325 = vmatpush2.msra.mxu0 0.0
          %326 = vmatprep.subr.mxu0 0.0
          %327 = vmatpush2.msra.mxu0 0.0
          %328 = vmatprep.subr.mxu0 0.0
          %329 = vmatpush2.msra.mxu0 0.0
          %330 = vmatprep.subr.mxu0 0.0
          %331 = vmatpush2.msra.mxu0 0.0
          %332 = vmatprep.subr.mxu0 0.0
          %333 = vmatpush2.msra.mxu0 0.0
          %334 = vmatprep.subr.mxu0 0.0
          %335 = vmatpush2.msra.mxu0 0.0
          %336 = vmatprep.mubr.f32.mxu0 0.0
          %337 = vmatmul.mubr.f32.gmra.mxu0 %v265
          %v338 = vpop.f32.mrf.mxu0
          %v339 = vadd.f32 0.0, %v338
          %v340 = vpop.f32.mrf.mxu0
          %v341 = vadd.f32 0.0, %v340
          %342 = vdwg.mxu0
          %v343 = vpack.c.bf16 %v339, %v339
          %v344 = vpack.c.bf16 %v341, %v341
          %v347 = vcombine.low %v343, %v344
          %v349 = vunpack.c.l.s4 1983009808
          %v350 = vunpack.c.0.s8 %v349
          %v351 = vlaneseq
          %v352 = vshrl.u32 %v351, 7
          %v353 = vsub.s32 %v350, %v352
          %v354 = vrot.slane %v347, %v353
          %356 = vst [vmem:[#allocation3] sm:$0xf] %v354
          %v357 = vld [vmem:[%s4] sm:$0xf]
          %v359 = vsel %vm263, %v357, 0
          %361 = vmatprep.subr.mxu0 0.0
          %362 = vmatpush1.msra.mxu0 0.0
          %363 = vmatprep.subr.mxu0 0.0
          %364 = vmatpush1.msra.mxu0 0.0
          %365 = vmatprep.subr.mxu0 0.0
          %366 = vmatpush1.msra.mxu0 0.0
          %367 = vmatprep.subr.mxu0 0.0
          %368 = vmatpush1.msra.mxu0 0.0
          %369 = vmatprep.subr.mxu0 0.0
          %370 = vmatpush1.msra.mxu0 0.0
          %371 = vmatprep.subr.mxu0 0.0
          %372 = vmatpush1.msra.mxu0 0.0
          %373 = vmatprep.subr.mxu0 0.0
          %374 = vmatpush1.msra.mxu0 0.0
          %375 = vmatprep.subr.mxu0 0.0
          %376 = vmatpush1.msra.mxu0 0.0
          %377 = vmatprep.subr.mxu0 0.0
          %378 = vmatpush1.msra.mxu0 0.0
          %379 = vmatprep.subr.mxu0 0.0
          %380 = vmatpush1.msra.mxu0 0.0
          %381 = vmatprep.subr.mxu0 0.0
          %382 = vmatpush1.msra.mxu0 0.0
          %383 = vmatprep.subr.mxu0 0.0
          %384 = vmatpush1.msra.mxu0 0.0
          %385 = vmatprep.subr.mxu0 0.0
          %386 = vmatpush1.msra.mxu0 0.0
          %387 = vmatprep.subr.mxu0 0.0
          %388 = vmatpush1.msra.mxu0 0.0
          %389 = vmatprep.subr.mxu0 0.0
          %390 = vmatpush1.msra.mxu0 0.0
          %391 = vmatprep.subr.mxu0 %v270
          %392 = vmatpush1.msra.mxu0 %v268
          %393 = vmatprep.subr.mxu0 0.0
          %394 = vmatpush2.msra.mxu0 0.0
          %395 = vmatprep.subr.mxu0 0.0
          %396 = vmatpush2.msra.mxu0 0.0
          %397 = vmatprep.subr.mxu0 0.0
          %398 = vmatpush2.msra.mxu0 0.0
          %399 = vmatprep.subr.mxu0 0.0
          %400 = vmatpush2.msra.mxu0 0.0
          %401 = vmatprep.subr.mxu0 0.0
          %402 = vmatpush2.msra.mxu0 0.0
          %403 = vmatprep.subr.mxu0 0.0
          %404 = vmatpush2.msra.mxu0 0.0
          %405 = vmatprep.subr.mxu0 0.0
          %406 = vmatpush2.msra.mxu0 0.0
          %407 = vmatprep.subr.mxu0 0.0
          %408 = vmatpush2.msra.mxu0 0.0
          %409 = vmatprep.subr.mxu0 0.0
          %410 = vmatpush2.msra.mxu0 0.0
          %411 = vmatprep.subr.mxu0 0.0
          %412 = vmatpush2.msra.mxu0 0.0
          %413 = vmatprep.subr.mxu0 0.0
          %414 = vmatpush2.msra.mxu0 0.0
          %415 = vmatprep.subr.mxu0 0.0
          %416 = vmatpush2.msra.mxu0 0.0
          %417 = vmatprep.subr.mxu0 0.0
          %418 = vmatpush2.msra.mxu0 0.0
          %419 = vmatprep.subr.mxu0 0.0
          %420 = vmatpush2.msra.mxu0 0.0
          %421 = vmatprep.subr.mxu0 0.0
          %422 = vmatpush2.msra.mxu0 0.0
          %423 = vmatprep.subr.mxu0 0.0
          %424 = vmatpush2.msra.mxu0 0.0
          %425 = vmatprep.mubr.f32.mxu0 0.0
          %426 = vmatmul.mubr.f32.gmra.mxu0 %v359
          %v427 = vpop.f32.mrf.mxu0
          %v428 = vadd.f32 0.0, %v427
          %v429 = vpop.f32.mrf.mxu0
          %v430 = vadd.f32 0.0, %v429
          %431 = vdwg.mxu0
          %v432 = vpack.c.bf16 %v428, %v428
          %v433 = vpack.c.bf16 %v430, %v430
          %v436 = vcombine.low %v432, %v433
          %v438 = vunpack.c.l.s4 1983009808
          %v439 = vunpack.c.0.s8 %v438
          %v440 = vlaneseq
          %v441 = vshrl.u32 %v440, 7
          %v442 = vsub.s32 %v439, %v441
          %v443 = vrot.slane %v436, %v442
          %445 = vst [vmem:[#allocation4] sm:$0xf] %v443
        $region44: #{_self_attention_flat.1} parent=39 // pred_fallthru
          _
        %s446 = smul.u32 %s25, 256
        %s447 = sshra.s32 %s446, 7
        %s448 = sand.u32 %s446, 127
        %s449 = smul.addr %s447, 2
        %s450 = scalar_lea.vmem [#allocation3], %s449
        %v451 = vld [vmem:[%s450] sm:$0xf]
        %v452 = vld [vmem:[#allocation2] sm:$0xf]
        %v455 = vunpack.c.l.s4 1983009808
        %v456 = vunpack.c.0.s8 %v455
        %v457 = vlaneseq
        %v458 = vshrl.u32 %v457, 7
        %v459 = vsub.s32 %v456, %v458
        %v460 = vrot.slane %v452, %v459
        %v461 = vcombine.high %v460, %v460
        %464 = vxpose.xlu0.c.b16.start [1/8] %v460, 128
        %465 = vxpose.xlu0.c.b16.cont [2/8] 0, 128
        %466 = vxpose.xlu0.c.b16.cont [3/8] 0, 128
        %467 = vxpose.xlu0.c.b16.cont [4/8] 0, 128
        %468 = vxpose.xlu0.c.b16.cont [5/8] 0, 128
        %469 = vxpose.xlu0.c.b16.cont [6/8] 0, 128
        %470 = vxpose.xlu0.c.b16.cont [7/8] 0, 128
        %471 = vxpose.xlu0.c.b16.end [8/8] 0, 128
        %v472 = vpop.trf.xlu0
        %v473 = vpop.trf.xlu0
        %v474 = vpop.trf.xlu0
        %v475 = vpop.trf.xlu0
        %v476 = vpop.trf.xlu0
        %v477 = vpop.trf.xlu0
        %v478 = vpop.trf.xlu0
        %v479 = vpop.trf.xlu0
        %480 = vxpose.xlu0.c.b16.start [1/8] %v461, 128
        %481 = vxpose.xlu0.c.b16.cont [2/8] 0, 128
        %482 = vxpose.xlu0.c.b16.cont [3/8] 0, 128
        %483 = vxpose.xlu0.c.b16.cont [4/8] 0, 128
        %484 = vxpose.xlu0.c.b16.cont [5/8] 0, 128
        %485 = vxpose.xlu0.c.b16.cont [6/8] 0, 128
        %486 = vxpose.xlu0.c.b16.cont [7/8] 0, 128
        %487 = vxpose.xlu0.c.b16.end [8/8] 0, 128
        %v488 = vpop.trf.xlu0
        %v489 = vpop.trf.xlu0
        %v490 = vpop.trf.xlu0
        %v491 = vpop.trf.xlu0
        %v492 = vpop.trf.xlu0
        %v493 = vpop.trf.xlu0
        %v494 = vpop.trf.xlu0
        %v495 = vpop.trf.xlu0
        %v498 = vunpack.c.l.s4 1983009808
        %v499 = vunpack.c.0.s8 %v498
        %v500 = vlaneseq
        %v501 = vshrl.u32 %v500, 7
        %v502 = vsub.s32 %v499, %v501
        %v503 = vrot.slane %v451, %v502
        %v504 = vcombine.high %v503, %v503
        %vm505 = vcmask 31744
        %v507 = vsel %vm505, %v472, 0
        %v510 = vsel %vm505, %v473, 0
        %v513 = vsel %vm505, %v474, 0
        %v516 = vsel %vm505, %v475, 0
        %v519 = vsel %vm505, %v476, 0
        %v522 = vsel %vm505, %v477, 0
        %v525 = vsel %vm505, %v478, 0
        %v528 = vsel %vm505, %v479, 0
        %v531 = vsel %vm505, %v488, 0
        %v534 = vsel %vm505, %v489, 0
        %v537 = vsel %vm505, %v490, 0
        %v540 = vsel %vm505, %v491, 0
        %v543 = vsel %vm505, %v492, 0
        %v546 = vsel %vm505, %v493, 0
        %v549 = vsel %vm505, %v494, 0
        %v552 = vsel %vm505, %v495, 0
        %vm554 = vcmask 1041408
        %v556 = vsel %vm554, %v503, 0
        %v559 = vsel %vm554, %v504, 0
        %561 = vmatprep.subr.bf16.mxu0 0
        %562 = vmatpush1.bf16.msra.mxu0 0
        %563 = vmatprep.subr.bf16.mxu0 0
        %564 = vmatpush1.bf16.msra.mxu0 0
        %565 = vmatprep.subr.bf16.mxu0 0
        %566 = vmatpush1.bf16.msra.mxu0 0
        %567 = vmatprep.subr.bf16.mxu0 0
        %568 = vmatpush1.bf16.msra.mxu0 0
        %569 = vmatprep.subr.bf16.mxu0 0
        %570 = vmatpush1.bf16.msra.mxu0 0
        %571 = vmatprep.subr.bf16.mxu0 0
        %572 = vmatpush1.bf16.msra.mxu0 0
        %573 = vmatprep.subr.bf16.mxu0 0
        %574 = vmatpush1.bf16.msra.mxu0 0
        %575 = vmatprep.subr.bf16.mxu0 %v559
        %576 = vmatpush1.bf16.msra.mxu0 %v556
        %577 = vmatprep.subr.bf16.mxu0 0
        %578 = vmatpush2.bf16.msra.mxu0 0
        %579 = vmatprep.subr.bf16.mxu0 0
        %580 = vmatpush2.bf16.msra.mxu0 0
        %581 = vmatprep.subr.bf16.mxu0 0
        %582 = vmatpush2.bf16.msra.mxu0 0
        %583 = vmatprep.subr.bf16.mxu0 0
        %584 = vmatpush2.bf16.msra.mxu0 0
        %585 = vmatprep.subr.bf16.mxu0 0
        %586 = vmatpush2.bf16.msra.mxu0 0
        %587 = vmatprep.subr.bf16.mxu0 0
        %588 = vmatpush2.bf16.msra.mxu0 0
        %589 = vmatprep.subr.bf16.mxu0 0
        %590 = vmatpush2.bf16.msra.mxu0 0
        %591 = vmatprep.subr.bf16.mxu0 0
        %592 = vmatpush2.bf16.msra.mxu0 0
        %593 = vmatprep.mubr.bf16.mxu0 0
        %594 = vmatmul.mubr.bf16.gmra.mxu0 %v507
        %v595 = vpop.f32.mrf.mxu0
        %v596 = vadd.f32 0.0, %v595
        %v597 = vpop.f32.mrf.mxu0
        %v598 = vadd.f32 0.0, %v597
        %v599 = vpop.f32.mrf.mxu0
        %v600 = vadd.f32 0.0, %v599
        %v601 = vpop.f32.mrf.mxu0
        %v602 = vadd.f32 0.0, %v601
        %603 = vmatprep.mubr.bf16.mxu0 0
        %604 = vmatmul.mubr.bf16.gmra.mxu0 %v510
        %v605 = vpop.f32.mrf.mxu0
        %v606 = vadd.f32 0.0, %v605
        %v607 = vpop.f32.mrf.mxu0
        %v608 = vadd.f32 0.0, %v607
        %v609 = vpop.f32.mrf.mxu0
        %v610 = vadd.f32 0.0, %v609
        %v611 = vpop.f32.mrf.mxu0
        %v612 = vadd.f32 0.0, %v611
        %613 = vmatprep.mubr.bf16.mxu0 0
        %614 = vmatmul.mubr.bf16.gmra.mxu0 %v513
        %v615 = vpop.f32.mrf.mxu0
        %v616 = vadd.f32 0.0, %v615
        %v617 = vpop.f32.mrf.mxu0
        %v618 = vadd.f32 0.0, %v617
        %v619 = vpop.f32.mrf.mxu0
        %v620 = vadd.f32 0.0, %v619
        %v621 = vpop.f32.mrf.mxu0
        %v622 = vadd.f32 0.0, %v621
        %623 = vmatprep.mubr.bf16.mxu0 0
        %624 = vmatmul.mubr.bf16.gmra.mxu0 %v516
        %v625 = vpop.f32.mrf.mxu0
        %v626 = vadd.f32 0.0, %v625
        %v627 = vpop.f32.mrf.mxu0
        %v628 = vadd.f32 0.0, %v627
        %v629 = vpop.f32.mrf.mxu0
        %v630 = vadd.f32 0.0, %v629
        %v631 = vpop.f32.mrf.mxu0
        %v632 = vadd.f32 0.0, %v631
        %633 = vmatprep.mubr.bf16.mxu0 0
        %634 = vmatmul.mubr.bf16.gmra.mxu0 %v519
        %v635 = vpop.f32.mrf.mxu0
        %v636 = vadd.f32 0.0, %v635
        %v637 = vpop.f32.mrf.mxu0
        %v638 = vadd.f32 0.0, %v637
        %v639 = vpop.f32.mrf.mxu0
        %v640 = vadd.f32 0.0, %v639
        %v641 = vpop.f32.mrf.mxu0
        %v642 = vadd.f32 0.0, %v641
        %643 = vmatprep.mubr.bf16.mxu0 0
        %644 = vmatmul.mubr.bf16.gmra.mxu0 %v522
        %v645 = vpop.f32.mrf.mxu0
        %v646 = vadd.f32 0.0, %v645
        %v647 = vpop.f32.mrf.mxu0
        %v648 = vadd.f32 0.0, %v647
        %v649 = vpop.f32.mrf.mxu0
        %v650 = vadd.f32 0.0, %v649
        %v651 = vpop.f32.mrf.mxu0
        %v652 = vadd.f32 0.0, %v651
        %653 = vmatprep.mubr.bf16.mxu0 0
        %654 = vmatmul.mubr.bf16.gmra.mxu0 %v525
        %v655 = vpop.f32.mrf.mxu0
        %v656 = vadd.f32 0.0, %v655
        %v657 = vpop.f32.mrf.mxu0
        %v658 = vadd.f32 0.0, %v657
        %v659 = vpop.f32.mrf.mxu0
        %v660 = vadd.f32 0.0, %v659
        %v661 = vpop.f32.mrf.mxu0
        %v662 = vadd.f32 0.0, %v661
        %663 = vmatprep.mubr.bf16.mxu0 0
        %664 = vmatmul.mubr.bf16.gmra.mxu0 %v528
        %v665 = vpop.f32.mrf.mxu0
        %v666 = vadd.f32 0.0, %v665
        %v667 = vpop.f32.mrf.mxu0
        %v668 = vadd.f32 0.0, %v667
        %v669 = vpop.f32.mrf.mxu0
        %v670 = vadd.f32 0.0, %v669
        %v671 = vpop.f32.mrf.mxu0
        %v672 = vadd.f32 0.0, %v671
        %673 = vmatprep.mubr.bf16.mxu0 0
        %674 = vmatmul.mubr.bf16.gmra.mxu0 %v531
        %v675 = vpop.f32.mrf.mxu0
        %v676 = vadd.f32 0.0, %v675
        %v677 = vpop.f32.mrf.mxu0
        %v678 = vadd.f32 0.0, %v677
        %v679 = vpop.f32.mrf.mxu0
        %v680 = vadd.f32 0.0, %v679
        %v681 = vpop.f32.mrf.mxu0
        %v682 = vadd.f32 0.0, %v681
        %683 = vmatprep.mubr.bf16.mxu0 0
        %684 = vmatmul.mubr.bf16.gmra.mxu0 %v534
        %v685 = vpop.f32.mrf.mxu0
        %v686 = vadd.f32 0.0, %v685
        %v687 = vpop.f32.mrf.mxu0
        %v688 = vadd.f32 0.0, %v687
        %v689 = vpop.f32.mrf.mxu0
        %v690 = vadd.f32 0.0, %v689
        %v691 = vpop.f32.mrf.mxu0
        %v692 = vadd.f32 0.0, %v691
        %693 = vmatprep.mubr.bf16.mxu0 0
        %694 = vmatmul.mubr.bf16.gmra.mxu0 %v537
        %v695 = vpop.f32.mrf.mxu0
        %v696 = vadd.f32 0.0, %v695
        %v697 = vpop.f32.mrf.mxu0
        %v698 = vadd.f32 0.0, %v697
        %v699 = vpop.f32.mrf.mxu0
        %v700 = vadd.f32 0.0, %v699
        %v701 = vpop.f32.mrf.mxu0
        %v702 = vadd.f32 0.0, %v701
        %703 = vmatprep.mubr.bf16.mxu0 0
        %704 = vmatmul.mubr.bf16.gmra.mxu0 %v540
        %v705 = vpop.f32.mrf.mxu0
        %v706 = vadd.f32 0.0, %v705
        %v707 = vpop.f32.mrf.mxu0
        %v708 = vadd.f32 0.0, %v707
        %v709 = vpop.f32.mrf.mxu0
        %v710 = vadd.f32 0.0, %v709
        %v711 = vpop.f32.mrf.mxu0
        %v712 = vadd.f32 0.0, %v711
        %713 = vmatprep.mubr.bf16.mxu0 0
        %714 = vmatmul.mubr.bf16.gmra.mxu0 %v543
        %v715 = vpop.f32.mrf.mxu0
        %v716 = vadd.f32 0.0, %v715
        %v717 = vpop.f32.mrf.mxu0
        %v718 = vadd.f32 0.0, %v717
        %v719 = vpop.f32.mrf.mxu0
        %v720 = vadd.f32 0.0, %v719
        %v721 = vpop.f32.mrf.mxu0
        %v722 = vadd.f32 0.0, %v721
        %723 = vmatprep.mubr.bf16.mxu0 0
        %724 = vmatmul.mubr.bf16.gmra.mxu0 %v546
        %v725 = vpop.f32.mrf.mxu0
        %v726 = vadd.f32 0.0, %v725
        %v727 = vpop.f32.mrf.mxu0
        %v728 = vadd.f32 0.0, %v727
        %v729 = vpop.f32.mrf.mxu0
        %v730 = vadd.f32 0.0, %v729
        %v731 = vpop.f32.mrf.mxu0
        %v732 = vadd.f32 0.0, %v731
        %733 = vmatprep.mubr.bf16.mxu0 0
        %734 = vmatmul.mubr.bf16.gmra.mxu0 %v549
        %v735 = vpop.f32.mrf.mxu0
        %v736 = vadd.f32 0.0, %v735
        %v737 = vpop.f32.mrf.mxu0
        %v738 = vadd.f32 0.0, %v737
        %v739 = vpop.f32.mrf.mxu0
        %v740 = vadd.f32 0.0, %v739
        %v741 = vpop.f32.mrf.mxu0
        %v742 = vadd.f32 0.0, %v741
        %743 = vmatprep.mubr.bf16.mxu0 0
        %744 = vmatmul.mubr.bf16.gmra.mxu0 %v552
        %v745 = vpop.f32.mrf.mxu0
        %v746 = vadd.f32 0.0, %v745
        %v747 = vpop.f32.mrf.mxu0
        %v748 = vadd.f32 0.0, %v747
        %v749 = vpop.f32.mrf.mxu0
        %v750 = vadd.f32 0.0, %v749
        %v751 = vpop.f32.mrf.mxu0
        %v752 = vadd.f32 0.0, %v751
        %753 = vdwg.mxu0
        %v754 = vmax.f32 %v596, %v606
        %v755 = vmax.f32 %v600, %v610
        %v756 = vmax.f32 %v754, %v616
        %v757 = vmax.f32 %v755, %v620
        %v758 = vmax.f32 %v756, %v626
        %v759 = vmax.f32 %v757, %v630
        %v760 = vmax.f32 %v758, %v636
        %v761 = vmax.f32 %v759, %v640
        %v762 = vmax.f32 %v760, %v646
        %v763 = vmax.f32 %v761, %v650
        %v764 = vmax.f32 %v762, %v656
        %v765 = vmax.f32 %v763, %v660
        %v766 = vmax.f32 %v764, %v666
        %v767 = vmax.f32 %v765, %v670
        %v768 = vmax.f32 %v766, %v676
        %v769 = vmax.f32 %v767, %v680
        %v770 = vmax.f32 %v768, %v686
        %v771 = vmax.f32 %v769, %v690
        %v772 = vmax.f32 %v770, %v696
        %v773 = vmax.f32 %v771, %v700
        %v774 = vmax.f32 %v772, %v706
        %v775 = vmax.f32 %v773, %v710
        %v776 = vmax.f32 %v774, %v716
        %v777 = vmax.f32 %v775, %v720
        %v778 = vmax.f32 %v776, %v726
        %v779 = vmax.f32 %v777, %v730
        %v780 = vmax.f32 %v778, %v736
        %v781 = vmax.f32 %v779, %v740
        %v782 = vmax.f32 %v780, %v746
        %v783 = vmax.f32 %v781, %v750
        %v784 = vmax.f32 %v782, %v783
        %v785 = vrot.slane %v784, 4
        %v786 = vmax.f32 %v784, %v785
        %v787 = vrot.slane %v786, 2
        %v788 = vmax.f32 %v786, %v787
        %v789 = vrot.slane %v788, 1
        %v790 = vmax.f32 %v788, %v789
        %v791 = vmax.f32 %v598, %v608
        %v792 = vmax.f32 %v602, %v612
        %v793 = vmax.f32 %v791, %v618
        %v794 = vmax.f32 %v792, %v622
        %v795 = vmax.f32 %v793, %v628
        %v796 = vmax.f32 %v794, %v632
        %v797 = vmax.f32 %v795, %v638
        %v798 = vmax.f32 %v796, %v642
        %v799 = vmax.f32 %v797, %v648
        %v800 = vmax.f32 %v798, %v652
        %v801 = vmax.f32 %v799, %v658
        %v802 = vmax.f32 %v800, %v662
        %v803 = vmax.f32 %v801, %v668
        %v804 = vmax.f32 %v802, %v672
        %v805 = vmax.f32 %v803, %v678
        %v806 = vmax.f32 %v804, %v682
        %v807 = vmax.f32 %v805, %v688
        %v808 = vmax.f32 %v806, %v692
        %v809 = vmax.f32 %v807, %v698
        %v810 = vmax.f32 %v808, %v702
        %v811 = vmax.f32 %v809, %v708
        %v812 = vmax.f32 %v810, %v712
        %v813 = vmax.f32 %v811, %v718
        %v814 = vmax.f32 %v812, %v722
        %v815 = vmax.f32 %v813, %v728
        %v816 = vmax.f32 %v814, %v732
        %v817 = vmax.f32 %v815, %v738
        %v818 = vmax.f32 %v816, %v742
        %v819 = vmax.f32 %v817, %v748
        %v820 = vmax.f32 %v818, %v752
        %v821 = vmax.f32 %v819, %v820
        %v822 = vrot.slane %v821, 4
        %v823 = vmax.f32 %v821, %v822
        %v824 = vrot.slane %v823, 2
        %v825 = vmax.f32 %v823, %v824
        %v826 = vrot.slane %v825, 1
        %v827 = vmax.f32 %v825, %v826
        %v828 = vsub.f32 %v596, %v790
        %v829 = vsub.f32 %v598, %v827
        %v830 = vsub.f32 %v600, %v790
        %v831 = vsub.f32 %v602, %v827
        %v832 = vsub.f32 %v606, %v790
        %v833 = vsub.f32 %v608, %v827
        %v834 = vsub.f32 %v610, %v790
        %v835 = vsub.f32 %v612, %v827
        %v836 = vsub.f32 %v616, %v790
        %v837 = vsub.f32 %v618, %v827
        %v838 = vsub.f32 %v620, %v790
        %v839 = vsub.f32 %v622, %v827
        %v840 = vsub.f32 %v626, %v790
        %v841 = vsub.f32 %v628, %v827
        %v842 = vsub.f32 %v630, %v790
        %v843 = vsub.f32 %v632, %v827
        %v844 = vsub.f32 %v636, %v790
        %v845 = vsub.f32 %v638, %v827
        %v846 = vsub.f32 %v640, %v790
        %v847 = vsub.f32 %v642, %v827
        %v848 = vsub.f32 %v646, %v790
        %v849 = vsub.f32 %v648, %v827
        %v850 = vsub.f32 %v650, %v790
        %v851 = vsub.f32 %v652, %v827
        %v852 = vsub.f32 %v656, %v790
        %v853 = vsub.f32 %v658, %v827
        %v854 = vsub.f32 %v660, %v790
        %v855 = vsub.f32 %v662, %v827
        %v856 = vsub.f32 %v666, %v790
        %v857 = vsub.f32 %v668, %v827
        %v858 = vsub.f32 %v670, %v790
        %v859 = vsub.f32 %v672, %v827
        %v860 = vsub.f32 %v676, %v790
        %v861 = vsub.f32 %v678, %v827
        %v862 = vsub.f32 %v680, %v790
        %v863 = vsub.f32 %v682, %v827
        %v864 = vsub.f32 %v686, %v790
        %v865 = vsub.f32 %v688, %v827
        %v866 = vsub.f32 %v690, %v790
        %v867 = vsub.f32 %v692, %v827
        %v868 = vsub.f32 %v696, %v790
        %v869 = vsub.f32 %v698, %v827
        %v870 = vsub.f32 %v700, %v790
        %v871 = vsub.f32 %v702, %v827
        %v872 = vsub.f32 %v706, %v790
        %v873 = vsub.f32 %v708, %v827
        %v874 = vsub.f32 %v710, %v790
        %v875 = vsub.f32 %v712, %v827
        %v876 = vsub.f32 %v716, %v790
        %v877 = vsub.f32 %v718, %v827
        %v878 = vsub.f32 %v720, %v790
        %v879 = vsub.f32 %v722, %v827
        %v880 = vsub.f32 %v726, %v790
        %v881 = vsub.f32 %v728, %v827
        %v882 = vsub.f32 %v730, %v790
        %v883 = vsub.f32 %v732, %v827
        %v884 = vsub.f32 %v736, %v790
        %v885 = vsub.f32 %v738, %v827
        %v886 = vsub.f32 %v740, %v790
        %v887 = vsub.f32 %v742, %v827
        %v888 = vsub.f32 %v746, %v790
        %v889 = vsub.f32 %v748, %v827
        %v890 = vsub.f32 %v750, %v790
        %v891 = vsub.f32 %v752, %v827
        %v892 = vmul.f32 %v828, 1.442695
        %v893 = vpow.pop %v892
        %v894 = vmul.f32 %v829, 1.442695
        %v895 = vpow.pop %v894
        %v896 = vmul.f32 %v830, 1.442695
        %v897 = vpow.pop %v896
        %v898 = vmul.f32 %v831, 1.442695
        %v899 = vpow.pop %v898
        %v900 = vmul.f32 %v832, 1.442695
        %v901 = vpow.pop %v900
        %v902 = vmul.f32 %v833, 1.442695
        %v903 = vpow.pop %v902
        %v904 = vmul.f32 %v834, 1.442695
        %v905 = vpow.pop %v904
        %v906 = vmul.f32 %v835, 1.442695
        %v907 = vpow.pop %v906
        %v908 = vmul.f32 %v836, 1.442695
        %v909 = vpow.pop %v908
        %v910 = vmul.f32 %v837, 1.442695
        %v911 = vpow.pop %v910
        %v912 = vmul.f32 %v838, 1.442695
        %v913 = vpow.pop %v912
        %v914 = vmul.f32 %v839, 1.442695
        %v915 = vpow.pop %v914
        %v916 = vmul.f32 %v840, 1.442695
        %v917 = vpow.pop %v916
        %v918 = vmul.f32 %v841, 1.442695
        %v919 = vpow.pop %v918
        %v920 = vmul.f32 %v842, 1.442695
        %v921 = vpow.pop %v920
        %v922 = vmul.f32 %v843, 1.442695
        %v923 = vpow.pop %v922
        %v924 = vmul.f32 %v844, 1.442695
        %v925 = vpow.pop %v924
        %v926 = vmul.f32 %v845, 1.442695
        %v927 = vpow.pop %v926
        %v928 = vmul.f32 %v846, 1.442695
        %v929 = vpow.pop %v928
        %v930 = vmul.f32 %v847, 1.442695
        %v931 = vpow.pop %v930
        %v932 = vmul.f32 %v848, 1.442695
        %v933 = vpow.pop %v932
        %v934 = vmul.f32 %v849, 1.442695
        %v935 = vpow.pop %v934
        %v936 = vmul.f32 %v850, 1.442695
        %v937 = vpow.pop %v936
        %v938 = vmul.f32 %v851, 1.442695
        %v939 = vpow.pop %v938
        %v940 = vmul.f32 %v852, 1.442695
        %v941 = vpow.pop %v940
        %v942 = vmul.f32 %v853, 1.442695
        %v943 = vpow.pop %v942
        %v944 = vmul.f32 %v854, 1.442695
        %v945 = vpow.pop %v944
        %v946 = vmul.f32 %v855, 1.442695
        %v947 = vpow.pop %v946
        %v948 = vmul.f32 %v856, 1.442695
        %v949 = vpow.pop %v948
        %v950 = vmul.f32 %v857, 1.442695
        %v951 = vpow.pop %v950
        %v952 = vmul.f32 %v858, 1.442695
        %v953 = vpow.pop %v952
        %v954 = vmul.f32 %v859, 1.442695
        %v955 = vpow.pop %v954
        %v956 = vmul.f32 %v860, 1.442695
        %v957 = vpow.pop %v956
        %v958 = vmul.f32 %v861, 1.442695
        %v959 = vpow.pop %v958
        %v960 = vmul.f32 %v862, 1.442695
        %v961 = vpow.pop %v960
        %v962 = vmul.f32 %v863, 1.442695
        %v963 = vpow.pop %v962
        %v964 = vmul.f32 %v864, 1.442695
        %v965 = vpow.pop %v964
        %v966 = vmul.f32 %v865, 1.442695
        %v967 = vpow.pop %v966
        %v968 = vmul.f32 %v866, 1.442695
        %v969 = vpow.pop %v968
        %v970 = vmul.f32 %v867, 1.442695
        %v971 = vpow.pop %v970
        %v972 = vmul.f32 %v868, 1.442695
        %v973 = vpow.pop %v972
        %v974 = vmul.f32 %v869, 1.442695
        %v975 = vpow.pop %v974
        %v976 = vmul.f32 %v870, 1.442695
        %v977 = vpow.pop %v976
        %v978 = vmul.f32 %v871, 1.442695
        %v979 = vpow.pop %v978
        %v980 = vmul.f32 %v872, 1.442695
        %v981 = vpow.pop %v980
        %v982 = vmul.f32 %v873, 1.442695
        %v983 = vpow.pop %v982
        %v984 = vmul.f32 %v874, 1.442695
        %v985 = vpow.pop %v984
        %v986 = vmul.f32 %v875, 1.442695
        %v987 = vpow.pop %v986
        %v988 = vmul.f32 %v876, 1.442695
        %v989 = vpow.pop %v988
        %v990 = vmul.f32 %v877, 1.442695
        %v991 = vpow.pop %v990
        %v992 = vmul.f32 %v878, 1.442695
        %v993 = vpow.pop %v992
        %v994 = vmul.f32 %v879, 1.442695
        %v995 = vpow.pop %v994
        %v996 = vmul.f32 %v880, 1.442695
        %v997 = vpow.pop %v996
        %v998 = vmul.f32 %v881, 1.442695
        %v999 = vpow.pop %v998
        %v1000 = vmul.f32 %v882, 1.442695
        %v1001 = vpow.pop %v1000
        %v1002 = vmul.f32 %v883, 1.442695
        %v1003 = vpow.pop %v1002
        %v1004 = vmul.f32 %v884, 1.442695
        %v1005 = vpow.pop %v1004
        %v1006 = vmul.f32 %v885, 1.442695
        %v1007 = vpow.pop %v1006
        %v1008 = vmul.f32 %v886, 1.442695
        %v1009 = vpow.pop %v1008
        %v1010 = vmul.f32 %v887, 1.442695
        %v1011 = vpow.pop %v1010
        %v1012 = vmul.f32 %v888, 1.442695
        %v1013 = vpow.pop %v1012
        %v1014 = vmul.f32 %v889, 1.442695
        %v1015 = vpow.pop %v1014
        %v1016 = vmul.f32 %v890, 1.442695
        %v1017 = vpow.pop %v1016
        %v1018 = vmul.f32 %v891, 1.442695
        %v1019 = vpow.pop %v1018
        %v1020 = vadd.f32 %v893, %v897
        %v1021 = vadd.f32 %v1020, %v901
        %v1022 = vadd.f32 %v1021, %v905
        %v1023 = vadd.f32 %v1022, %v909
        %v1024 = vadd.f32 %v1023, %v913
        %v1025 = vadd.f32 %v1024, %v917
        %v1026 = vadd.f32 %v1025, %v921
        %v1027 = vadd.f32 %v1026, %v925
        %v1028 = vadd.f32 %v1027, %v929
        %v1029 = vadd.f32 %v1028, %v933
        %v1030 = vadd.f32 %v1029, %v937
        %v1031 = vadd.f32 %v1030, %v941
        %v1032 = vadd.f32 %v1031, %v945
        %v1033 = vadd.f32 %v1032, %v949
        %v1034 = vadd.f32 %v1033, %v953
        %v1035 = vadd.f32 %v1034, %v957
        %v1036 = vadd.f32 %v1035, %v961
        %v1037 = vadd.f32 %v1036, %v965
        %v1038 = vadd.f32 %v1037, %v969
        %v1039 = vadd.f32 %v1038, %v973
        %v1040 = vadd.f32 %v1039, %v977
        %v1041 = vadd.f32 %v1040, %v981
        %v1042 = vadd.f32 %v1041, %v985
        %v1043 = vadd.f32 %v1042, %v989
        %v1044 = vadd.f32 %v1043, %v993
        %v1045 = vadd.f32 %v1044, %v997
        %v1046 = vadd.f32 %v1045, %v1001
        %v1047 = vadd.f32 %v1046, %v1005
        %v1048 = vadd.f32 %v1047, %v1009
        %v1049 = vadd.f32 %v1048, %v1013
        %v1050 = vadd.f32 %v1049, %v1017
        %v1051 = vrot.slane %v1050, 4
        %v1052 = vadd.f32 %v1050, %v1051
        %v1053 = vrot.slane %v1052, 2
        %v1054 = vadd.f32 %v1052, %v1053
        %v1055 = vrot.slane %v1054, 1
        %v1056 = vadd.f32 %v1054, %v1055
        %v1057 = vadd.f32 %v895, %v899
        %v1058 = vadd.f32 %v1057, %v903
        %v1059 = vadd.f32 %v1058, %v907
        %v1060 = vadd.f32 %v1059, %v911
        %v1061 = vadd.f32 %v1060, %v915
        %v1062 = vadd.f32 %v1061, %v919
        %v1063 = vadd.f32 %v1062, %v923
        %v1064 = vadd.f32 %v1063, %v927
        %v1065 = vadd.f32 %v1064, %v931
        %v1066 = vadd.f32 %v1065, %v935
        %v1067 = vadd.f32 %v1066, %v939
        %v1068 = vadd.f32 %v1067, %v943
        %v1069 = vadd.f32 %v1068, %v947
        %v1070 = vadd.f32 %v1069, %v951
        %v1071 = vadd.f32 %v1070, %v955
        %v1072 = vadd.f32 %v1071, %v959
        %v1073 = vadd.f32 %v1072, %v963
        %v1074 = vadd.f32 %v1073, %v967
        %v1075 = vadd.f32 %v1074, %v971
        %v1076 = vadd.f32 %v1075, %v975
        %v1077 = vadd.f32 %v1076, %v979
        %v1078 = vadd.f32 %v1077, %v983
        %v1079 = vadd.f32 %v1078, %v987
        %v1080 = vadd.f32 %v1079, %v991
        %v1081 = vadd.f32 %v1080, %v995
        %v1082 = vadd.f32 %v1081, %v999
        %v1083 = vadd.f32 %v1082, %v1003
        %v1084 = vadd.f32 %v1083, %v1007
        %v1085 = vadd.f32 %v1084, %v1011
        %v1086 = vadd.f32 %v1085, %v1015
        %v1087 = vadd.f32 %v1086, %v1019
        %v1088 = vrot.slane %v1087, 4
        %v1089 = vadd.f32 %v1087, %v1088
        %v1090 = vrot.slane %v1089, 2
        %v1091 = vadd.f32 %v1089, %v1090
        %v1092 = vrot.slane %v1091, 1
        %v1093 = vadd.f32 %v1091, %v1092
        %v1094 = vrcp.pop %v1056
        %v1095 = vrcp.pop %v1093
        %v1096 = vmul.f32 %v893, %v1094
        %v1097 = vmul.f32 %v895, %v1095
        %v1098 = vmul.f32 %v897, %v1094
        %v1099 = vmul.f32 %v899, %v1095
        %v1100 = vmul.f32 %v901, %v1094
        %v1101 = vmul.f32 %v903, %v1095
        %v1102 = vmul.f32 %v905, %v1094
        %v1103 = vmul.f32 %v907, %v1095
        %v1104 = vmul.f32 %v909, %v1094
        %v1105 = vmul.f32 %v911, %v1095
        %v1106 = vmul.f32 %v913, %v1094
        %v1107 = vmul.f32 %v915, %v1095
        %v1108 = vmul.f32 %v917, %v1094
        %v1109 = vmul.f32 %v919, %v1095
        %v1110 = vmul.f32 %v921, %v1094
        %v1111 = vmul.f32 %v923, %v1095
        %v1112 = vmul.f32 %v925, %v1094
        %v1113 = vmul.f32 %v927, %v1095
        %v1114 = vmul.f32 %v929, %v1094
        %v1115 = vmul.f32 %v931, %v1095
        %v1116 = vmul.f32 %v933, %v1094
        %v1117 = vmul.f32 %v935, %v1095
        %v1118 = vmul.f32 %v937, %v1094
        %v1119 = vmul.f32 %v939, %v1095
        %v1120 = vmul.f32 %v941, %v1094
        %v1121 = vmul.f32 %v943, %v1095
        %v1122 = vmul.f32 %v945, %v1094
        %v1123 = vmul.f32 %v947, %v1095
        %v1124 = vmul.f32 %v949, %v1094
        %v1125 = vmul.f32 %v951, %v1095
        %v1126 = vmul.f32 %v953, %v1094
        %v1127 = vmul.f32 %v955, %v1095
        %v1128 = vmul.f32 %v957, %v1094
        %v1129 = vmul.f32 %v959, %v1095
        %v1130 = vmul.f32 %v961, %v1094
        %v1131 = vmul.f32 %v963, %v1095
        %v1132 = vmul.f32 %v965, %v1094
        %v1133 = vmul.f32 %v967, %v1095
        %v1134 = vmul.f32 %v969, %v1094
        %v1135 = vmul.f32 %v971, %v1095
        %v1136 = vmul.f32 %v973, %v1094
        %v1137 = vmul.f32 %v975, %v1095
        %v1138 = vmul.f32 %v977, %v1094
        %v1139 = vmul.f32 %v979, %v1095
        %v1140 = vmul.f32 %v981, %v1094
        %v1141 = vmul.f32 %v983, %v1095
        %v1142 = vmul.f32 %v985, %v1094
        %v1143 = vmul.f32 %v987, %v1095
        %v1144 = vmul.f32 %v989, %v1094
        %v1145 = vmul.f32 %v991, %v1095
        %v1146 = vmul.f32 %v993, %v1094
        %v1147 = vmul.f32 %v995, %v1095
        %v1148 = vmul.f32 %v997, %v1094
        %v1149 = vmul.f32 %v999, %v1095
        %v1150 = vmul.f32 %v1001, %v1094
        %v1151 = vmul.f32 %v1003, %v1095
        %v1152 = vmul.f32 %v1005, %v1094
        %v1153 = vmul.f32 %v1007, %v1095
        %v1154 = vmul.f32 %v1009, %v1094
        %v1155 = vmul.f32 %v1011, %v1095
        %v1156 = vmul.f32 %v1013, %v1094
        %v1157 = vmul.f32 %v1015, %v1095
        %v1158 = vmul.f32 %v1017, %v1094
        %v1159 = vmul.f32 %v1019, %v1095
        %s1160 = smul.addr %s447, 4
        %s1161 = scalar_lea.vmem %s237, %s1160
        %v1162 = vld [vmem:[%s1161] sm:$0xff]
        %v1163 = vld [vmem:[#allocation4] sm:$0xf]
        %v1164 = vpack.c.bf16 %v1098, %v1096
        %v1165 = vpack.c.bf16 %v1099, %v1097
        %v1166 = vpack.c.bf16 %v1102, %v1100
        %v1167 = vpack.c.bf16 %v1103, %v1101
        %v1168 = vpack.c.bf16 %v1106, %v1104
        %v1169 = vpack.c.bf16 %v1107, %v1105
        %v1170 = vpack.c.bf16 %v1110, %v1108
        %v1171 = vpack.c.bf16 %v1111, %v1109
        %v1172 = vpack.c.bf16 %v1114, %v1112
        %v1173 = vpack.c.bf16 %v1115, %v1113
        %v1174 = vpack.c.bf16 %v1118, %v1116
        %v1175 = vpack.c.bf16 %v1119, %v1117
        %v1176 = vpack.c.bf16 %v1122, %v1120
        %v1177 = vpack.c.bf16 %v1123, %v1121
        %v1178 = vpack.c.bf16 %v1126, %v1124
        %v1179 = vpack.c.bf16 %v1127, %v1125
        %v1180 = vpack.c.bf16 %v1130, %v1128
        %v1181 = vpack.c.bf16 %v1131, %v1129
        %v1182 = vpack.c.bf16 %v1134, %v1132
        %v1183 = vpack.c.bf16 %v1135, %v1133
        %v1184 = vpack.c.bf16 %v1138, %v1136
        %v1185 = vpack.c.bf16 %v1139, %v1137
        %v1186 = vpack.c.bf16 %v1142, %v1140
        %v1187 = vpack.c.bf16 %v1143, %v1141
        %v1188 = vpack.c.bf16 %v1146, %v1144
        %v1189 = vpack.c.bf16 %v1147, %v1145
        %v1190 = vpack.c.bf16 %v1150, %v1148
        %v1191 = vpack.c.bf16 %v1151, %v1149
        %v1192 = vpack.c.bf16 %v1154, %v1152
        %v1193 = vpack.c.bf16 %v1155, %v1153
        %v1194 = vpack.c.bf16 %v1158, %v1156
        %v1195 = vpack.c.bf16 %v1159, %v1157
        %v1198 = vunpack.c.l.s4 1983009808
        %v1199 = vunpack.c.0.s8 %v1198
        %v1200 = vlaneseq
        %v1201 = vshrl.u32 %v1200, 7
        %v1202 = vsub.s32 %v1199, %v1201
        %v1203 = vrot.slane %v1163, %v1202
        %v1204 = vcombine.high %v1203, %v1203
        %1207 = vmatprep.subr.bf16.mxu0 %v1179
        %1208 = vmatpush1.bf16.msra.mxu0 %v1178
        %1209 = vmatprep.subr.bf16.mxu0 %v1177
        %1210 = vmatpush1.bf16.msra.mxu0 %v1176
        %1211 = vmatprep.subr.bf16.mxu0 %v1175
        %1212 = vmatpush1.bf16.msra.mxu0 %v1174
        %1213 = vmatprep.subr.bf16.mxu0 %v1173
        %1214 = vmatpush1.bf16.msra.mxu0 %v1172
        %1215 = vmatprep.subr.bf16.mxu0 %v1171
        %1216 = vmatpush1.bf16.msra.mxu0 %v1170
        %1217 = vmatprep.subr.bf16.mxu0 %v1169
        %1218 = vmatpush1.bf16.msra.mxu0 %v1168
        %1219 = vmatprep.subr.bf16.mxu0 %v1167
        %1220 = vmatpush1.bf16.msra.mxu0 %v1166
        %1221 = vmatprep.subr.bf16.mxu0 %v1165
        %1222 = vmatpush1.bf16.msra.mxu0 %v1164
        %1223 = vmatprep.subr.bf16.mxu0 %v1195
        %1224 = vmatpush2.bf16.msra.mxu0 %v1194
        %1225 = vmatprep.subr.bf16.mxu0 %v1193
        %1226 = vmatpush2.bf16.msra.mxu0 %v1192
        %1227 = vmatprep.subr.bf16.mxu0 %v1191
        %1228 = vmatpush2.bf16.msra.mxu0 %v1190
        %1229 = vmatprep.subr.bf16.mxu0 %v1189
        %1230 = vmatpush2.bf16.msra.mxu0 %v1188
        %1231 = vmatprep.subr.bf16.mxu0 %v1187
        %1232 = vmatpush2.bf16.msra.mxu0 %v1186
        %1233 = vmatprep.subr.bf16.mxu0 %v1185
        %1234 = vmatpush2.bf16.msra.mxu0 %v1184
        %1235 = vmatprep.subr.bf16.mxu0 %v1183
        %1236 = vmatpush2.bf16.msra.mxu0 %v1182
        %1237 = vmatprep.subr.bf16.mxu0 %v1181
        %1238 = vmatpush2.bf16.msra.mxu0 %v1180
        %1239 = vmatprep.mubr.bf16.mxu0 %v1204
        %1240 = vmatmul.mubr.bf16.gmra.mxu0 %v1203
        %v1241 = vpop.f32.mrf.mxu0
        %v1242 = vadd.f32 0.0, %v1241
        %v1243 = vpop.f32.mrf.mxu0
        %v1244 = vadd.f32 0.0, %v1243
        %v1245 = vpop.f32.mrf.mxu0
        %v1246 = vpop.f32.mrf.mxu0
        %1247 = vdwg.mxu0
        %s1248 = sld [smem:[#allocation5]]
        %v1249 = vstv %s1248
        %v1250 = vmul.f32 %v1249, %v1242
        %v1251 = vmul.f32 %v1249, %v1244
        %v1253 = vcombine.high %v1162, %v1162
        %v1255 = vadd.f32 %v1250, %v1162
        %v1256 = vadd.f32 %v1251, %v1253
        %v1259 = vcombine.low %v1255, %v1256
        %1261 = vst [vmem:[%s232] sm:$0xff] %v1259
        %s1262 = sand.u32 %s152, 1
        %s1263 = scalar_lea.sflag [#allocation7], %s1262
        %s1264 = sand.u32 %s152, 1
        %s1265 = smul.addr %s1264, 8
        %s1266 = scalar_lea.vmem [#allocation6], %s1265
        // Predicated region
        $region45: #{_self_attention_flat.1} parent=39 // pred_check
          %p1267 = pneg %p162
        $region46: #{_self_attention_flat.1} parent=39 // pred_check_branch
          %1269 = sbr.rel (%p1267) target = $region48
        $region47: #{_self_attention_flat.1} parent=39 // pred_region
          %s1270 = smul.u32 2, %s25
          %s1272 = ssub.s32 128, 128
          %1273 = vsyncadd %s1263, %s1272
          %s1274 = smul.addr %s24, 2
          %s1275 = sadd.s32 %s1270, %s1274
          %s1276 = smul.addr %s1275, 64
          %s1277 = scalar_lea.hbm %s5, %s1276
          %s1279 = sshll.u32 %s1266, 4
          %s1280 = int_to_ptr.vmem [resolvable:$true] %s1279
          %1282 = dma.vmem_to_hbm [thread:$0]  %s1280, 128, %s1277, %s1263
        $region48: #{_self_attention_flat.1} parent=39 // pred_fallthru
          _
      $region40: #{_self_attention_flat.1} parent=5 // pred_fallthru
        _
      %p1283 = scmp.le.s32.totalorder 2, %s15
      // Predicated region
      $region49: #{_self_attention_flat.1} parent=5 // pred_check
        %p1284 = pneg %p1283
      $region50: #{_self_attention_flat.1} parent=5 // pred_check_branch
        %1286 = sbr.rel (%p1284) target = $region52
      $region51: #{_self_attention_flat.1} parent=5 // pred_region
        %s1287 = ssub.s32 %s15, 2
        // Predicated region
        $region53: #{_self_attention_flat.1} parent=51 // pred_check
          %p1288 = pneg %p168
        $region54: #{_self_attention_flat.1} parent=51 // pred_check_branch
          %1290 = sbr.rel (%p1288) target = $region56
        $region55: #{_self_attention_flat.1} parent=51 // pred_region
          %s1291 = sand.u32 %s153, 1
          %s1292 = scalar_lea.sflag [#allocation7], %s1291
          %s1293 = sand.u32 %s153, 1
          %s1294 = smul.addr %s1293, 8
          %s1295 = scalar_lea.vmem [#allocation6], %s1294
          %1296 = dma.done %s1292, 128
        $region56: #{_self_attention_flat.1} parent=51 // pred_fallthru
          _
      $region52: #{_self_attention_flat.1} parent=5 // pred_fallthru
        _
    $region6: #{_self_attention_flat.1} parent=1 // loop_footer
      %s19 = sadd.s32 1, %s15
    $region7: #{_self_attention_flat.1} parent=1 // loop_footer_branch
      %14 = sbr.rel target = $region3
    $region8: #{_self_attention_flat.1} parent=1 // loop_exit
      _
    %1297 = vsyncpa [#allocation7], 1
    %s1298 = scalar_lea.sflag [#allocation7], 1
    %1299 = vsyncpa %s1298, 1

</llo_original>
